<compile_context>
chip_gen: v5e
topology: v5e:2x2
jax: 0.10.0
libtpu: 0.0.40
codegen_flags: <defaults>
</compile_context>

<pallas_src>
import math

import numpy as np
import jax
import jax.numpy as jnp
from jax.experimental import pallas as pl
from jax.experimental.pallas import tpu as pltpu


# ---------------------------------------------------------------------------
# Index generation (deterministic, mirrors the PyTorch buffer construction).
# ---------------------------------------------------------------------------
def _generate_lc2lcm_indices(lmax: int, cmax: int) -> np.ndarray:
    # e.g. lmax=1, cmax=2: [0, 1, 2, 2, 2, 3, 3, 3]
    idx = [l * cmax + c
           for l in range(lmax + 1)
           for c in range(cmax)
           for _ in range(2 * l + 1)]
    return np.asarray(idx, dtype=np.int32)


def _generate_m2lcm_indices(lmax: int, cmax: int) -> np.ndarray:
    # e.g. lmax=1, cmax=2: [0, 0, 1, 2, 3, 1, 2, 3]
    idx = [l * l + m
           for l in range(lmax + 1)
           for _ in range(cmax)
           for m in range(2 * l + 1)]
    return np.asarray(idx, dtype=np.int32)


def _vmem_capacity_bytes() -> int:
    try:
        return int(pltpu.get_tpu_info().vmem_capacity_bytes)
    except Exception:
        # Conservative default = v7x per-TensorCore VMEM; fine for v5e/v6e too
        # because this kernel's footprint is small.
        return 64 << 20


# ---------------------------------------------------------------------------
# Pallas kernel: out_tile = x_tile @ block_diag_one_hot   (gather-as-matmul)
# ---------------------------------------------------------------------------
def _broadcast_gto_kernel(x_ref, onehot_ref, o_ref):
    # Exact: every output element is 1.0 * one input element (+ zeros).
    o_ref[...] = jnp.dot(
        x_ref[...], onehot_ref[...],
        preferred_element_type=jnp.float32,
    ).astype(o_ref.dtype)


class BroadcastGTOTensor:
    """JAX/Pallas equivalent of the PyTorch BroadcastGTOTensor module."""

    # MXU path is f32/bf16 only; f16 / f64 / integers take the exact gather.
    _PALLAS_DTYPES = (jnp.dtype('float32'), jnp.dtype('bfloat16'))

    def __init__(self, lmax: int, cmax: int, src: str = 'lc', dst: str = 'lcm',
                 tile_rows: int = 8192, min_pallas_rows: int = 1024):
        assert src in ('lc', 'm')
        assert dst in ('lcm',)
        self.src = src
        self.dst = dst
        self.lmax = lmax
        self.cmax = cmax
        if src == 'lc':
            self.src_dim = (lmax + 1) * cmax
            indices = _generate_lc2lcm_indices(lmax, cmax)
        else:
            self.src_dim = (lmax + 1) ** 2
            indices = _generate_m2lcm_indices(lmax, cmax)
        self.dst_dim = (lmax + 1) ** 2 * cmax
        self.indices = indices                      # (dst_dim,) numpy int32
        self._indices_dev = jnp.asarray(indices)    # for the gather fallback

        # Max packed rows per grid step (rounded to the widest sublane tile).
        # 8192 packed rows moves >= ~2.5 MB per step even in bf16, so the
        # ~0.35 us fixed per-step pipeline overhead stays < ~20%.
        self.max_tile_rows = max(16, (int(tile_rows) // 16) * 16)
        # Tiny inputs skip Pallas: a pallas_call + single-block grid costs a
        # few us of fixed overhead that a plain gather avoids.
        self.min_pallas_rows = int(min_pallas_rows)
        self._vmem_cap = _vmem_capacity_bytes()

        # --- pack factor P: only the OUTPUT needs lane-dense (x128) packing --
        self.pack = self._pick_pack_factor()
        p = self.pack

        # --- block-diagonal one-hot selection matrix (P*src, P*dst) ----------
        single = np.zeros((self.src_dim, self.dst_dim), dtype=np.float32)
        single[indices, np.arange(self.dst_dim)] = 1.0
        block = np.zeros((p * self.src_dim, p * self.dst_dim), dtype=np.float32)
        for k in range(p):
            block[k * self.src_dim:(k + 1) * self.src_dim,
                  k * self.dst_dim:(k + 1) * self.dst_dim] = single
        self._onehot_np = block
        self._onehot_cache = {}   # dtype -> device constant

    # -----------------------------------------------------------------------
    def _pick_pack_factor(self) -> int:
        # Lane-dense *output* is the big measured lever; the input block's
        # last dim equals the full array dim so masked input lanes are fine
        # (and the input is 2-4x smaller than the output anyway).
        p = 128 // math.gcd(self.dst_dim, 128)
        # Keep the resident one-hot constant modest (<= 8 MiB in f32).
        while p > 1 and (p * self.src_dim) * (p * self.dst_dim) * 4 > (8 << 20):
            p //= 2
        return max(p, 1)

    def _onehot_for(self, dtype):
        key = jnp.dtype(dtype)
        got = self._onehot_cache.get(key)
        if got is None:
            got = jnp.asarray(self._onehot_np, dtype=key)   # 0/1 exact in bf16
            self._onehot_cache[key] = got
        return got

    # -----------------------------------------------------------------------
    def __call__(self, x: jax.Array) -> jax.Array:
        assert x.shape[-1] == self.src_dim, (
            f'Input dimension mismatch! Should be {self.src_dim}, '
            f'but got {x.shape[-1]} instead!')
        if self.src == self.dst:
            return x

        lead_shape = x.shape[:-1]
        n_rows = int(np.prod(lead_shape)) if lead_shape else 1
        dtype = jnp.dtype(x.dtype)

        # Exact gather fallback: unsupported dtypes, empty, or tiny inputs.
        if (n_rows == 0
                or dtype not in self._PALLAS_DTYPES
                or n_rows < self.min_pallas_rows):
            return x[..., self._indices_dev]
        # TODO(synk): on v5e, f32 inputs may become MXU-bound (f32 matmul
        # decomposes into multiple bf16 passes); consider bf16 activations or
        # a VPU lane-select variant there.

        p = self.pack
        src_packed = p * self.src_dim
        dst_packed = p * self.dst_dim
        itemsize = dtype.itemsize
        sub = 16 if itemsize == 2 else 8          # native sublane tile

        # Split a < P row tail off to the exact gather instead of padding:
        # no jnp.pad of the input and no out[:n] slice of the (4x larger)
        # output, i.e. no extra full HBM passes.  Common case: n_tail == 0.
        x2d = x.reshape(n_rows, self.src_dim)
        n_tail = n_rows % p
        n_main = n_rows - n_tail
        if n_main == 0:
            return x[..., self._indices_dev]

        x_main = x2d if n_tail == 0 else x2d[:n_main]
        n_packed = n_main // p
        # Contiguous row-major reshape -> free (no data movement).
        xp = x_main.reshape(n_packed, src_packed)

        # --- tile the packed-row axis within a per-generation VMEM budget ----
        in_row = src_packed * itemsize
        out_row = dst_packed * itemsize
        onehot_bytes = src_packed * dst_packed * itemsize
        budget = max(2 << 20, min(self._vmem_cap // 2, 40 << 20))
        fit = max(sub, (budget - 2 * onehot_bytes) // (2 * (in_row + out_row)))
        tile = min(self.max_tile_rows, int(fit))
        tile = max(sub, (tile // sub) * sub)
        if n_packed <= tile:
            tile = n_packed                        # block == full array dims
        grid = (pl.cdiv(n_packed, tile),)          # ragged last block is OK:
        # OOB input rows read garbage, but each packed output row depends only
        # on its own packed input row, and OOB output rows are discarded.

        usage = 2 * onehot_bytes + 2 * tile * (in_row + out_row)
        vmem_limit = None
        if usage + (4 << 20) > (32 << 20):         # above default scoped limit
            vmem_limit = int(min(self._vmem_cap * 7 // 8, usage + (8 << 20)))

        onehot = self._onehot_for(dtype)
        cost = pl.CostEstimate(
            flops=2 * n_packed * src_packed * dst_packed,
            transcendentals=0,
            bytes_accessed=(n_packed * (src_packed + dst_packed)
                            + src_packed * dst_packed) * itemsize)

        outp = pl.pallas_call(
            _broadcast_gto_kernel,
            out_shape=jax.ShapeDtypeStruct((n_packed, dst_packed), dtype),
            grid_spec=pltpu.PrefetchScalarGridSpec(
                num_scalar_prefetch=0,
                grid=grid,
                in_specs=[
                    # Row-tiled, double-buffered input tile.
                    pl.BlockSpec((tile, src_packed), lambda i: (i, 0)),
                    # Constant block index -> selection matrix stays VMEM
                    # resident across all grid steps.
                    pl.BlockSpec((src_packed, dst_packed), lambda i: (0, 0)),
                ],
                out_specs=pl.BlockSpec((tile, dst_packed), lambda i: (i, 0)),
            ),
            # "parallel" lets Mosaic shard the row grid across v7x's two
            # TensorCores; it is neutral on the single-core v5e/v6e.
            compiler_params=pltpu.CompilerParams(
                dimension_semantics=("parallel",),
                vmem_limit_bytes=vmem_limit),
            cost_estimate=cost,
        )(xp, onehot)

        # Packed -> logical layout is bit-identical in row-major: free reshape.
        out_main = outp.reshape(n_main, self.dst_dim)
        if n_tail:
            tail_out = x2d[n_main:][..., self._indices_dev]
            out2d = jnp.concatenate([out_main, tail_out], axis=0)
        else:
            out2d = out_main
        return out2d.reshape(*lead_shape, self.dst_dim)


# ---------------------------------------------------------------------------
# Pure-JAX reference for correctness checking.
# ---------------------------------------------------------------------------
def _reference(x, indices):
    return x[..., jnp.asarray(indices)]


if __name__ == "__main__":
    key = jax.random.PRNGKey(0)
    lmax, cmax = 3, 2
    k1, k2, k3, k4 = jax.random.split(key, 4)

    # --- 1) src='lc', f32: small tile_rows forces a multi-block grid with a
    #         ragged last block (385 packed rows / 64 per step); 1540 rows is
    #         a multiple of P=4 so the aligned (no-tail) fast path is used. ---
    mod_lc = BroadcastGTOTensor(lmax, cmax, src='lc', dst='lcm', tile_rows=64)
    x_lc = jax.random.normal(k1, (2, 10, 77, mod_lc.src_dim), dtype=jnp.float32)
    out_lc = jax.block_until_ready(mod_lc(x_lc))
    ref_lc = _reference(x_lc, mod_lc.indices)
    assert out_lc.shape == (2, 10, 77, mod_lc.dst_dim)
    np.testing.assert_array_equal(np.asarray(out_lc), np.asarray(ref_lc))

    # --- 2) src='m', bf16, default tiling: 1090 rows -> 1088 through Pallas,
    #         2-row tail through the exact gather (no pad / slice passes). ----
    mod_m = BroadcastGTOTensor(lmax, cmax, src='m', dst='lcm')
    x_m = jax.random.normal(k2, (2, 5, 109, mod_m.src_dim), dtype=jnp.bfloat16)
    out_m = jax.block_until_ready(mod_m(x_m))
    ref_m = _reference(x_m, mod_m.indices)
    assert out_m.shape == (2, 5, 109, mod_m.dst_dim)
    np.testing.assert_array_equal(
        np.asarray(jnp.asarray(out_m, jnp.float32)),
        np.asarray(jnp.asarray(ref_m, jnp.float32)))

    # --- 3) tiny input with Pallas forced (min_pallas_rows=0): 15 rows ->
    #         3 packed rows (block == full dims) + 3-row gather tail. ---------
    mod_tiny = BroadcastGTOTensor(lmax, cmax, src='lc', dst='lcm',
                                  min_pallas_rows=0)
    x_tiny = jax.random.normal(k3, (3, 5, mod_tiny.src_dim), dtype=jnp.float32)
    out_tiny = jax.block_until_ready(mod_tiny(x_tiny))
    np.testing.assert_array_equal(
        np.asarray(out_tiny), np.asarray(_reference(x_tiny, mod_tiny.indices)))

    # --- 4) integer dtype: exact gather fallback (no MXU path). --------------
    x_int = jax.random.randint(k4, (3, 5, mod_lc.src_dim), 0, 100,
                               dtype=jnp.int32)
    out_int = jax.block_until_ready(mod_lc(x_int))
    np.testing.assert_array_equal(
        np.asarray(out_int), np.asarray(_reference(x_int, mod_lc.indices)))

    print("KERNEL_OK")
</pallas_src>

<mosaic_0001>
module attributes {stable_mosaic.version = 11 : i64} {
  func.func @_broadcast_gto_kernel(%arg0: i32, %arg1: memref<64x32xf32, #tpu.memory_space<vmem>>, %arg2: memref<32x128xf32, #tpu.memory_space<vmem>>, %arg3: memref<64x128xf32, #tpu.memory_space<vmem>>) attributes {dimension_semantics = [#tpu.dimension_semantics<parallel>], iteration_bounds = array<i64: 7>, scalar_prefetch = 0 : i64, scratch_operands = 0 : i64, tpu.core_type = #tpu.core_type<tc>, window_params = [{transform_indices = @transform_0, window_bounds = array<i64: 64, 32>}, {pipeline_mode = #tpu.pipeline_mode<synchronous>, transform_indices = @transform_1, window_bounds = array<i64: 32, 128>}, {transform_indices = @transform_2, window_bounds = array<i64: 64, 128>}]} {
    %c0 = arith.constant 0 : index
    %c0_0 = arith.constant 0 : index
    %0 = vector.load %arg1[%c0, %c0_0] : memref<64x32xf32, #tpu.memory_space<vmem>>, vector<64x32xf32>
    %c0_1 = arith.constant 0 : index
    %c0_2 = arith.constant 0 : index
    %1 = vector.load %arg2[%c0_1, %c0_2] : memref<32x128xf32, #tpu.memory_space<vmem>>, vector<32x128xf32>
    %cst = arith.constant dense<0.000000e+00> : vector<64x128xf32>
    %2 = tpu.matmul %0, %1, %cst {dimension_numbers = #tpu.dot_dimension_numbers<[1], [0], [0], [1], [0, 0, 1, 1], [], []>} : vector<64x32xf32>, vector<32x128xf32>, vector<64x128xf32> -> vector<64x128xf32>
    %c0_3 = arith.constant 0 : index
    %c0_4 = arith.constant 0 : index
    %3 = vector.load %arg3[%c0_3, %c0_4] : memref<64x128xf32, #tpu.memory_space<vmem>>, vector<64x128xf32>
    tpu.vector_store %arg3[%c0_3, %c0_4], %2 {strides = array<i32>} : memref<64x128xf32, #tpu.memory_space<vmem>>, vector<64x128xf32>,
    return
  }
  func.func @transform_0(%arg0: i32) -> (i32, i32) {
    %c0_i32 = arith.constant 0 : i32
    %c0_i32_0 = arith.constant 0 : i32
    return %arg0, %c0_i32 : i32, i32
  }
  func.func @transform_1(%arg0: i32) -> (i32, i32) {
    %c0_i32 = arith.constant 0 : i32
    %c0_i32_0 = arith.constant 0 : i32
    %c0_i32_1 = arith.constant 0 : i32
    return %c0_i32, %c0_i32_0 : i32, i32
  }
  func.func @transform_2(%arg0: i32) -> (i32, i32) {
    %c0_i32 = arith.constant 0 : i32
    %c0_i32_0 = arith.constant 0 : i32
    return %arg0, %c0_i32 : i32, i32
  }
}

</mosaic_0001>

<llo_original>
// kernel: tpu_custom_call.1
$region0: #{tpu_custom_call.1}
  #allocation0 [shape = 'u32[]', space=smem, size = 0x4, offset = 0x4, fixed_abs, tag = 'smem constant byte address 0x4 - core index']
  #allocation1 [shape = 'u32[72,128]{1,0:T(1,128)}', space=vmem, size = 0x9000, scoped, tag = 'internal scratch']
  %s0 = inlined_call_operand.vmem [shape: f32[385,32], index: 0, kind: input, shape index: {}]
  %s1 = inlined_call_operand.vmem [shape: f32[32,128], index: 1, kind: input, shape index: {}]
  %s2 = inlined_call_operand.hbm [shape: f32[385,128], index: 2, kind: output, shape index: {}]
  %s3 = sld [smem:[#allocation0]]
  $region41: #{tpu_custom_call.1} parent=0
    _
  %s5 = ssub.s32 1, %s3
  %s6 = scalar_select 0, %s5, %s3
  $region1: #{tpu_custom_call.1} parent=0
    #allocation2 [shape = 'u8[65536]{0}', space=vmem, size = 0x10000, scoped, tag = 'output window, operand 0']
    #allocation3 [shape = 's32[2]{0}', space=sflag, size = 0x8, scoped, tag = 'scoped memory for tpu_custom_call.1']
    %7 = vsyncpa [#allocation3], 0
    %s8 = scalar_lea.sflag [#allocation3], 1
    %9 = vsyncpa %s8, 0
    loop: start=0, step=1, limit=9
    $region2: #{tpu_custom_call.1} parent=1 // loop_pre_header
      _
    $region3: #{tpu_custom_call.1} parent=1 // loop_header
      %s11 = sphi 0, %s15
      %p12 = scmp.ge.s32.totalorder %s11, 9
      %s21 = sphi 0, %s23
      %s24 = sphi 0, %s21
      %s25 = sphi 0, %s24
      %s41 = sphi 0, %s25
      %s45 = sphi 0, %s45
      %s47 = sphi 0, %s45
      %s48 = sphi 0, %s47
      %s62 = sphi 0, %s48
      %s68 = sphi 0, %s70
      %s71 = sphi 0, %s68
      %s72 = sphi 0, %s71
      %s88 = sphi 0, %s72
    $region4: #{tpu_custom_call.1} parent=1 // loop_header_branch
      %14 = sbr.rel (%p12) target = $region8
    $region5: #{tpu_custom_call.1} parent=1 // loop_body
      %s16 = ssub.s32 %s11, 1
      %s17 = ssub.s32 %s11, 2
      %s18 = sadd.s32 %s11, 1
      %s19 = ssub.s32 %s11, %s18
      %p20 = scmp.eq.s32.totalorder %s19, 0
      %s22 = sadd.s32 %s21, 1
      %s23 = scalar_select %p20, %s21, %s22
      %p26 = pneg %p20
      %p27 = scmp.eq.s32.totalorder %s11, 6
      %p28 = por %p26, %p27
      %p29 = scmp.ne.s32.totalorder %s21, %s24
      %p30 = scmp.eq.s32.totalorder %s11, 0
      %p31 = por %p29, %p30
      %p32 = scmp.ne.s32.totalorder %s21, %s24
      %p33 = scmp.eq.s32.totalorder %s16, 6
      %p34 = por %p32, %p33
      %p35 = scmp.ne.s32.totalorder %s24, %s25
      %p36 = scmp.eq.s32.totalorder %s16, 0
      %p37 = por %p35, %p36
      %p38 = scmp.ne.s32.totalorder %s24, %s25
      %p39 = scmp.eq.s32.totalorder %s17, 6
      %p40 = por %p38, %p39
      %p42 = scmp.ne.s32.totalorder %s25, %s41
      %p43 = scmp.eq.s32.totalorder %s17, 0
      %p44 = por %p42, %p43
      %s46 = sadd.s32 %s45, 1
      %p49 = scmp.eq.s32.totalorder %s11, 6
      %p50 = scmp.ne.s32.totalorder %s45, %s47
      %p51 = scmp.eq.s32.totalorder %s11, 0
      %p52 = por %p50, %p51
      %p53 = scmp.ne.s32.totalorder %s45, %s47
      %p54 = scmp.eq.s32.totalorder %s16, 6
      %p55 = por %p53, %p54
      %p56 = scmp.ne.s32.totalorder %s47, %s48
      %p57 = scmp.eq.s32.totalorder %s16, 0
      %p58 = por %p56, %p57
      %p59 = scmp.ne.s32.totalorder %s47, %s48
      %p60 = scmp.eq.s32.totalorder %s17, 6
      %p61 = por %p59, %p60
      %p63 = scmp.ne.s32.totalorder %s48, %s62
      %p64 = scmp.eq.s32.totalorder %s17, 0
      %p65 = por %p63, %p64
      %s66 = ssub.s32 %s11, %s18
      %p67 = scmp.eq.s32.totalorder %s66, 0
      %s69 = sadd.s32 %s68, 1
      %s70 = scalar_select %p67, %s68, %s69
      %p73 = pneg %p67
      %p74 = scmp.eq.s32.totalorder %s11, 6
      %p75 = por %p73, %p74
      %p76 = scmp.ne.s32.totalorder %s68, %s71
      %p77 = scmp.eq.s32.totalorder %s11, 0
      %p78 = por %p76, %p77
      %p79 = scmp.ne.s32.totalorder %s68, %s71
      %p80 = scmp.eq.s32.totalorder %s16, 6
      %p81 = por %p79, %p80
      %p82 = scmp.ne.s32.totalorder %s71, %s72
      %p83 = scmp.eq.s32.totalorder %s16, 0
      %p84 = por %p82, %p83
      %p85 = scmp.ne.s32.totalorder %s71, %s72
      %p86 = scmp.eq.s32.totalorder %s17, 6
      %p87 = por %p85, %p86
      %p89 = scmp.ne.s32.totalorder %s72, %s88
      %p90 = scmp.eq.s32.totalorder %s17, 0
      %p91 = por %p89, %p90
      %p92 = scmp.le.s32.totalorder 1, %s11
      %p93 = scmp.lt.s32.totalorder %s11, 8
      %p94 = pnand %p92, %p93
      %p95 = pneg %p94
      // Predicated region
      $region9: #{tpu_custom_call.1} parent=5 // pred_check
        _
      $region10: #{tpu_custom_call.1} parent=5 // pred_check_branch
        %97 = sbr.rel (%p94) target = $region12
      $region11: #{tpu_custom_call.1} parent=5 // pred_region
        %s98 = ssub.s32 %s11, 1
        // Predicated region
        $region13: #{tpu_custom_call.1} parent=11 // pred_check
          %p99 = pneg %p58
        $region14: #{tpu_custom_call.1} parent=11 // pred_check_branch
          %101 = sbr.rel (%p99) target = $region16
        $region15: #{tpu_custom_call.1} parent=11 // pred_region
          _
        $region16: #{tpu_custom_call.1} parent=11 // pred_fallthru
          _
      $region12: #{tpu_custom_call.1} parent=5 // pred_fallthru
        _
      %p102 = scmp.lt.s32.totalorder %s11, 7
      // Predicated region
      $region17: #{tpu_custom_call.1} parent=5 // pred_check
        %p103 = pneg %p102
      $region18: #{tpu_custom_call.1} parent=5 // pred_check_branch
        %105 = sbr.rel (%p103) target = $region20
      $region19: #{tpu_custom_call.1} parent=5 // pred_region
        // Predicated region
        $region21: #{tpu_custom_call.1} parent=19 // pred_check
          %p106 = pneg %p31
        $region22: #{tpu_custom_call.1} parent=19 // pred_check_branch
          %108 = sbr.rel (%p106) target = $region24
        $region23: #{tpu_custom_call.1} parent=19 // pred_region
          %s109 = smul.u32 8, %s11
          %s110 = ssub.s32 49, %s109
          %p111 = scmp.lt.s32.totalorder %s110, 8
          %s112 = scalar_select %p111, %s110, 8
          %s113 = smul.u32 8, %s112
          %p114 = scmp.lt.s32.totalorder %s109, 48
          %s115 = scalar_select %p114, %s109, 48
          %s116 = smul.addr %s115, 8
          %s117 = scalar_lea.vmem %s0, %s116
          %s118 = smul.u32 8, %s11
          %s119 = ssub.s32 49, %s118
          %p120 = scmp.lt.s32.totalorder %s119, 8
          %s121 = scalar_select %p120, %s119, 8
          %s122 = smul.u32 8, %s121
        $region24: #{tpu_custom_call.1} parent=19 // pred_fallthru
          _
      $region20: #{tpu_custom_call.1} parent=5 // pred_fallthru
        _
      %p123 = scmp.le.s32.totalorder 1, %s11
      %p124 = scmp.lt.s32.totalorder %s11, 8
      %p125 = pnand %p123, %p124
      %p126 = pneg %p125
      // Predicated region
      $region25: #{tpu_custom_call.1} parent=5 // pred_check
        _
      $region26: #{tpu_custom_call.1} parent=5 // pred_check_branch
        %128 = sbr.rel (%p125) target = $region28
      $region27: #{tpu_custom_call.1} parent=5 // pred_region
        %s129 = ssub.s32 %s11, 1
        %s130 = smul.u32 8, %s16
        %s131 = ssub.s32 49, %s130
        %p132 = scmp.lt.s32.totalorder %s131, 8
        %s133 = scalar_select %p132, %s131, 8
        %s134 = smul.u32 8, %s133
        %p135 = scmp.lt.s32.totalorder %s130, 48
        %s136 = scalar_select %p135, %s130, 48
        %s137 = smul.addr %s136, 8
        %s138 = scalar_lea.vmem %s0, %s137
        %p139 = pneg %p37
        %p140 = pneg %p34
        %p141 = pneg %p58
        %p142 = pneg %p55
        %p143 = pneg %p84
        %p144 = pneg %p81
        %s145 = sand.u32 %s71, 1
        %s146 = scalar_lea.sflag [#allocation3], %s145
        %s147 = sand.u32 %s71, 1
        %s148 = smul.addr %s147, 64
        %s149 = scalar_lea.vmem [#allocation2], %s148
        %s150 = smul.u32 8, %s16
        %s151 = ssub.s32 49, %s150
        %p152 = scmp.lt.s32.totalorder %s151, 8
        %s153 = scalar_select %p152, %s151, 8
        %s154 = smul.u32 8, %s153
        %p155 = scmp.lt.s32.totalorder %s150, 48
        %s156 = scalar_select %p155, %s150, 48
        %s157 = smul.addr %s156, 8
        %s158 = scalar_lea.vmem %s0, %s157
        %s159 = smul.u32 8, %s16
        %s160 = ssub.s32 49, %s159
        %p161 = scmp.lt.s32.totalorder %s160, 8
        %s162 = scalar_select %p161, %s160, 8
        %s163 = smul.u32 8, %s162
        %s164 = smul.u32 8, %s16
        %s165 = ssub.s32 49, %s164
        %p166 = scmp.lt.s32.totalorder %s165, 8
        %s167 = scalar_select %p166, %s165, 8
        %s168 = smul.u32 8, %s167
        %v169 = vld [vmem:[%s158] sm:$0xff]
        %v170 = vld [vmem:[%s158 + $0x8] sm:$0xff]
        %v171 = vld [vmem:[%s158 + $0x10] sm:$0xff]
        %v172 = vld [vmem:[%s158 + $0x18] sm:$0xff]
        %v173 = vld [vmem:[%s158 + $0x20] sm:$0xff]
        %v174 = vld [vmem:[%s158 + $0x28] sm:$0xff]
        %v175 = vld [vmem:[%s158 + $0x30] sm:$0xff]
        %v176 = vld [vmem:[%s158 + $0x38] sm:$0xff]
        %v177 = vld [vmem:[%s1] sm:$0xff]
        %v178 = vld [vmem:[%s1 + $0x8] sm:$0xff]
        %v179 = vld [vmem:[%s1 + $0x10] sm:$0xff]
        %v180 = vld [vmem:[%s1 + $0x18] sm:$0xff]
        %vm181 = vcmask 261120
        %v183 = vsel %vm181, %v169, 0
        %v186 = vsel %vm181, %v170, 0
        %v189 = vsel %vm181, %v171, 0
        %v192 = vsel %vm181, %v172, 0
        %v195 = vsel %vm181, %v173, 0
        %v198 = vsel %vm181, %v174, 0
        %v201 = vsel %vm181, %v175, 0
        %v204 = vsel %vm181, %v176, 0
        %206 = vmatpush.msra.mxu0 0.0
        %207 = vmatpush.msra.mxu0 0.0
        %208 = vmatpush.msra.mxu0 0.0
        %209 = vmatpush.msra.mxu0 0.0
        %210 = vmatpush.msra.mxu0 0.0
        %211 = vmatpush.msra.mxu0 0.0
        %212 = vmatpush.msra.mxu0 0.0
        %213 = vmatpush.msra.mxu0 0.0
        %214 = vmatpush.msra.mxu0 0.0
        %215 = vmatpush.msra.mxu0 0.0
        %216 = vmatpush.msra.mxu0 0.0
        %217 = vmatpush.msra.mxu0 0.0
        %218 = vmatpush.msra.mxu0 %v180
        %219 = vmatpush.msra.mxu0 %v179
        %220 = vmatpush.msra.mxu0 %v178
        %221 = vmatpush.msra.mxu0 %v177
        %222 = vmatmul.f32.gmra.mxu0 %v183
        %v223 = vpop.f32.mrf.mxu0
        %v224 = vadd.f32 0.0, %v223
        %225 = vmatmul.f32.gmra.mxu0 %v186
        %v226 = vpop.f32.mrf.mxu0
        %v227 = vadd.f32 0.0, %v226
        %228 = vmatmul.f32.gmra.mxu0 %v189
        %v229 = vpop.f32.mrf.mxu0
        %v230 = vadd.f32 0.0, %v229
        %231 = vmatmul.f32.gmra.mxu0 %v192
        %v232 = vpop.f32.mrf.mxu0
        %v233 = vadd.f32 0.0, %v232
        %234 = vmatmul.f32.gmra.mxu0 %v195
        %v235 = vpop.f32.mrf.mxu0
        %v236 = vadd.f32 0.0, %v235
        %237 = vmatmul.f32.gmra.mxu0 %v198
        %v238 = vpop.f32.mrf.mxu0
        %v239 = vadd.f32 0.0, %v238
        %240 = vmatmul.f32.gmra.mxu0 %v201
        %v241 = vpop.f32.mrf.mxu0
        %v242 = vadd.f32 0.0, %v241
        %243 = vmatmul.f32.gmra.mxu0 %v204
        %v244 = vpop.f32.mrf.mxu0
        %v245 = vadd.f32 0.0, %v244
        %246 = vdwg.mxu0
        %247 = vst [vmem:[%s149] sm:$0xff] %v224
        %248 = vst [vmem:[%s149 + $0x8] sm:$0xff] %v227
        %249 = vst [vmem:[%s149 + $0x10] sm:$0xff] %v230
        %250 = vst [vmem:[%s149 + $0x18] sm:$0xff] %v233
        %251 = vst [vmem:[%s149 + $0x20] sm:$0xff] %v236
        %252 = vst [vmem:[%s149 + $0x28] sm:$0xff] %v239
        %253 = vst [vmem:[%s149 + $0x30] sm:$0xff] %v242
        %254 = vst [vmem:[%s149 + $0x38] sm:$0xff] %v245
        %s255 = sand.u32 %s71, 1
        %s256 = scalar_lea.sflag [#allocation3], %s255
        %s257 = sand.u32 %s71, 1
        %s258 = smul.addr %s257, 64
        %s259 = scalar_lea.vmem [#allocation2], %s258
        // Predicated region
        $region29: #{tpu_custom_call.1} parent=27 // pred_check
          %p260 = pneg %p81
        $region30: #{tpu_custom_call.1} parent=27 // pred_check_branch
          %262 = sbr.rel (%p260) target = $region32
        $region31: #{tpu_custom_call.1} parent=27 // pred_region
          %s263 = smul.u32 8, %s16
          %s264 = ssub.s32 49, %s263
          %p265 = scmp.lt.s32.totalorder %s264, 8
          %s266 = scalar_select %p265, %s264, 8
          %s267 = smul.u32 8, %s266
          %s268 = ssub.s32 64, %s267
          %s269 = sshll.u32 %s268, 4
          %270 = vsyncadd %s256, %s269
          %p271 = scmp.ne.s32.totalorder 0, %s267
          %s272 = smul.addr %s263, 8
          %s273 = scalar_lea.hbm %s2, %s272
          %s274 = smul.u32 8, %s266
          %s275 = sshll.u32 %s259, 4
          %s276 = int_to_ptr.vmem [resolvable:$true] %s275
          %s277 = sshll.u32 %s273, 4
          %s278 = int_to_ptr.hbm [resolvable:$true] %s277
          %s279 = sshll.u32 %s274, 4
          %283 = dma.vmem_to_hbm [thread:$0]  (%p271), %s276, %s279, %s278, %s256, 128, 128, 8
        $region32: #{tpu_custom_call.1} parent=27 // pred_fallthru
          _
      $region28: #{tpu_custom_call.1} parent=5 // pred_fallthru
        _
      %p284 = scmp.le.s32.totalorder 2, %s11
      // Predicated region
      $region33: #{tpu_custom_call.1} parent=5 // pred_check
        %p285 = pneg %p284
      $region34: #{tpu_custom_call.1} parent=5 // pred_check_branch
        %287 = sbr.rel (%p285) target = $region36
      $region35: #{tpu_custom_call.1} parent=5 // pred_region
        %s288 = ssub.s32 %s11, 2
        // Predicated region
        $region37: #{tpu_custom_call.1} parent=35 // pred_check
          %p289 = pneg %p87
        $region38: #{tpu_custom_call.1} parent=35 // pred_check_branch
          %291 = sbr.rel (%p289) target = $region40
        $region39: #{tpu_custom_call.1} parent=35 // pred_region
          %s292 = sand.u32 %s72, 1
          %s293 = scalar_lea.sflag [#allocation3], %s292
          %s294 = sand.u32 %s72, 1
          %s295 = smul.addr %s294, 64
          %s296 = scalar_lea.vmem [#allocation2], %s295
          %298 = dma.done %s293, 1024
        $region40: #{tpu_custom_call.1} parent=35 // pred_fallthru
          _
      $region36: #{tpu_custom_call.1} parent=5 // pred_fallthru
        _
    $region6: #{tpu_custom_call.1} parent=1 // loop_footer
      %s15 = sadd.s32 1, %s11
    $region7: #{tpu_custom_call.1} parent=1 // loop_footer_branch
      %10 = sbr.rel target = $region3
    $region8: #{tpu_custom_call.1} parent=1 // loop_exit
      _
    %299 = vsyncpa [#allocation3], 1
    %s300 = scalar_lea.sflag [#allocation3], 1
    %301 = vsyncpa %s300, 1

</llo_original>
